<compile_context>
chip_gen: v6e
topology: v6e:2x2x1
jax: 0.10.0
libtpu: 0.0.40
codegen_flags: <defaults>
</compile_context>

<pallas_src>
import functools

import jax
import jax.numpy as jnp
from jax.experimental import pallas as pl
from jax.experimental.pallas import tpu as pltpu

_LANES = 128
_MAX_TILE_ROWS = 512  # 512 x 128 x 4B = 256 KiB per buffer -> safe on v7x VMEM.


def _final_layer_kernel(x_ref, o_ref, *, inv_norm, bias):
    # Pure elementwise scale + shift on the VPU; inv_norm/bias are Python
    # floats baked into the bundle as immediates (no vreg broadcast needed).
    o_ref[...] = x_ref[...] * inv_norm + bias


def final_layer(in_tensor, norm=1, bias=-5):
    """JAX/Pallas equivalent of FinalLayer.forward.

    in_tensor: (B, C, *trailing) with prod(trailing) == 1 (e.g. (B, C, 1, 1)),
               or already (B, C).
    Returns: (B, C) array, same dtype as the input.
    """
    assert norm != 0, "Norm 0 not supported (matches PyTorch assert)."
    B, C = in_tensor.shape[:2]
    # .view(*shape[:2]) is only legal if the remaining elements collapse to (B, C).
    x2d = in_tensor.reshape(B, C)
    dtype = x2d.dtype

    # ---- Lane-dense re-layout: flatten and pad to a (rows_pad, 128) slab. ----
    n = B * C
    rows_needed = pl.cdiv(n, _LANES)
    # Tile rows: multiple of 8 sublanes, capped for VMEM (v7x-safe).
    tile_rows = min(_MAX_TILE_ROWS, ((rows_needed + 7) // 8) * 8)
    rows_pad = pl.cdiv(rows_needed, tile_rows) * tile_rows
    n_pad = rows_pad * _LANES

    flat = x2d.reshape(-1)
    if n_pad != n:
        flat = jnp.pad(flat, (0, n_pad - n))
    slab = flat.reshape(rows_pad, _LANES)

    grid = (rows_pad // tile_rows,)

    kernel = functools.partial(
        _final_layer_kernel,
        inv_norm=float(1.0 / norm),
        bias=float(bias),
    )

    out_slab = pl.pallas_call(
        kernel,
        out_shape=jax.ShapeDtypeStruct((rows_pad, _LANES), dtype),
        grid=grid,
        in_specs=[pl.BlockSpec((tile_rows, _LANES), lambda i: (i, 0))],
        out_specs=pl.BlockSpec((tile_rows, _LANES), lambda i: (i, 0)),
        compiler_params=pltpu.CompilerParams(
            dimension_semantics=("parallel",)
        ),
    )(slab)

    # Undo the lane-dense re-layout / padding.
    return out_slab.reshape(-1)[:n].reshape(B, C)


if __name__ == "__main__":
    key = jax.random.PRNGKey(0)

    norm = 2.0   # inverse temperature T^{-1}
    bias = -5.0  # constant logit shift

    # Production-like shape: NCHW with 1x1 spatial.
    B, C = 2, 16
    x = jax.random.normal(key, (B, C, 1, 1), dtype=jnp.float32)
    out = jax.block_until_ready(final_layer(x, norm=norm, bias=bias))
    ref = x.reshape(B, C) / norm + bias
    assert out.shape == (B, C)
    assert jnp.allclose(out, ref, atol=1e-6, rtol=1e-6)

    # Second shape exercising padding of a non-multiple-of-128 flat size.
    B2, C2 = 4, 37
    x2 = jax.random.normal(jax.random.PRNGKey(1), (B2, C2, 1, 1), dtype=jnp.float32)
    out2 = jax.block_until_ready(final_layer(x2, norm=3.0, bias=1.5))
    ref2 = x2.reshape(B2, C2) / 3.0 + 1.5
    assert out2.shape == (B2, C2)
    assert jnp.allclose(out2, ref2, atol=1e-5, rtol=1e-5)

    print("KERNEL_OK")
</pallas_src>

<mosaic_0001>
module attributes {stable_mosaic.version = 11 : i64} {
  func.func @_final_layer_kernel(%arg0: i32, %arg1: memref<8x128xf32, #tpu.memory_space<vmem>>, %arg2: memref<8x128xf32, #tpu.memory_space<vmem>>) attributes {dimension_semantics = [#tpu.dimension_semantics<parallel>], iteration_bounds = array<i64: 1>, scalar_prefetch = 0 : i64, scratch_operands = 0 : i64, tpu.core_type = #tpu.core_type<tc>, window_params = [{transform_indices = @transform_0, window_bounds = array<i64: 8, 128>}, {transform_indices = @transform_1, window_bounds = array<i64: 8, 128>}]} {
    %c0 = arith.constant 0 : index
    %c0_0 = arith.constant 0 : index
    %0 = vector.load %arg1[%c0, %c0_0] : memref<8x128xf32, #tpu.memory_space<vmem>>, vector<8x128xf32>
    %cst = arith.constant 5.000000e-01 : f32
    %1 = vector.broadcast %cst : f32 to vector<8x128xf32>
    %2 = arith.mulf %0, %1 : vector<8x128xf32>
    %cst_1 = arith.constant -5.000000e+00 : f32
    %3 = vector.broadcast %cst_1 : f32 to vector<8x128xf32>
    %4 = arith.addf %2, %3 : vector<8x128xf32>
    %c0_2 = arith.constant 0 : index
    %c0_3 = arith.constant 0 : index
    %5 = vector.load %arg2[%c0_2, %c0_3] : memref<8x128xf32, #tpu.memory_space<vmem>>, vector<8x128xf32>
    tpu.vector_store %arg2[%c0_2, %c0_3], %4 {strides = array<i32>} : memref<8x128xf32, #tpu.memory_space<vmem>>, vector<8x128xf32>,
    return
  }
  func.func @transform_0(%arg0: i32) -> (i32, i32) {
    %c0_i32 = arith.constant 0 : i32
    %c0_i32_0 = arith.constant 0 : i32
    return %arg0, %c0_i32 : i32, i32
  }
  func.func @transform_1(%arg0: i32) -> (i32, i32) {
    %c0_i32 = arith.constant 0 : i32
    %c0_i32_0 = arith.constant 0 : i32
    return %arg0, %c0_i32 : i32, i32
  }
}

</mosaic_0001>

<llo_original>
// kernel: tpu_custom_call.1
$region0: #{tpu_custom_call.1}
  #allocation0 [shape = 'u32[]', space=smem, size = 0x4, offset = 0x4, fixed_abs, tag = 'smem constant byte address 0x4 - core index']
  #allocation1 [shape = 'u32[144,128]{1,0:T(1,128)}', space=vmem, size = 0x12000, scoped, tag = 'internal scratch']
  %s0 = inlined_call_operand.hbm [shape: f32[8,128], index: 0, kind: input, shape index: {}]
  %s1 = inlined_call_operand.hbm [shape: f32[8,128], index: 1, kind: output, shape index: {}]
  %s2 = sld [smem:[#allocation0]]
  $region18: #{tpu_custom_call.1} parent=0
    _
  %s4 = ssub.s32 1, %s2
  %s5 = scalar_select 0, %s4, %s2
  $region1: #{tpu_custom_call.1} parent=0
    #allocation2 [shape = 'u8[4096]{0}', space=vmem, size = 0x1000, scoped, tag = 'input window, operand 0, single buffered']
    #allocation3 [shape = 's32[1]{0}', space=sflag, size = 0x4, scoped, tag = 'scoped memory for tpu_custom_call.1']
    #allocation4 [shape = 's32[1]{0}', space=sflag, size = 0x4, scoped, tag = 'scoped memory for tpu_custom_call.1']
    #allocation5 [shape = 'u8[4096]{0}', space=vmem, size = 0x1000, scoped, tag = 'output window, operand 0, single buffered']
    %6 = vsyncpa [#allocation3], 0
    %7 = vsyncpa [#allocation4], 0
    // Predicated region
    $region2: #{tpu_custom_call.1} parent=1 // pred_check
      _
    $region3: #{tpu_custom_call.1} parent=1 // pred_check_branch
      %9 = sbr.rel (0) target = $region5
    $region4: #{tpu_custom_call.1} parent=1 // pred_region
      %s11 = ssub.s32 128, 128
      %12 = vsyncadd [#allocation3], %s11
      %s14 = sshll.u32 [#allocation2], 4
      %s15 = int_to_ptr.vmem [resolvable:$true] %s14
      %17 = dma.hbm_to_vmem [thread:$0]  %s0, 128, %s15, [#allocation3]
    $region5: #{tpu_custom_call.1} parent=1 // pred_fallthru
      _
    // Predicated region
    $region6: #{tpu_custom_call.1} parent=1 // pred_check
      _
    $region7: #{tpu_custom_call.1} parent=1 // pred_check_branch
      %19 = sbr.rel (0) target = $region9
    $region8: #{tpu_custom_call.1} parent=1 // pred_region
      %20 = dma.done [#allocation3], 128
    $region9: #{tpu_custom_call.1} parent=1 // pred_fallthru
      _
    %v21 = vld [vmem:[#allocation2] sm:$0xff]
    %v22 = vmul.f32 %v21, 0.5
    %v23 = vadd.f32 %v22, -5.0
    %24 = vst [vmem:[#allocation5] sm:$0xff] %v23
    // Predicated region
    $region10: #{tpu_custom_call.1} parent=1 // pred_check
      _
    $region11: #{tpu_custom_call.1} parent=1 // pred_check_branch
      %26 = sbr.rel (0) target = $region13
    $region12: #{tpu_custom_call.1} parent=1 // pred_region
      %s28 = ssub.s32 128, 128
      %29 = vsyncadd [#allocation4], %s28
      %s31 = sshll.u32 [#allocation5], 4
      %s32 = int_to_ptr.vmem [resolvable:$true] %s31
      %34 = dma.vmem_to_hbm [thread:$0]  %s32, 128, %s1, [#allocation4]
    $region13: #{tpu_custom_call.1} parent=1 // pred_fallthru
      _
    // Predicated region
    $region14: #{tpu_custom_call.1} parent=1 // pred_check
      _
    $region15: #{tpu_custom_call.1} parent=1 // pred_check_branch
      %36 = sbr.rel (0) target = $region17
    $region16: #{tpu_custom_call.1} parent=1 // pred_region
      %37 = dma.done [#allocation4], 128
    $region17: #{tpu_custom_call.1} parent=1 // pred_fallthru
      _
    %38 = vsyncpa [#allocation3], 1
    %39 = vsyncpa [#allocation4], 1

</llo_original>
